<compile_context>
chip_gen: v7x
topology: tpu7x:2x2x1
jax: 0.10.0
libtpu: 0.0.40
codegen_flags: <defaults>
</compile_context>

<pallas_src>
import functools

import jax
import jax.numpy as jnp
from jax.experimental import pallas as pl
from jax.experimental.pallas import tpu as pltpu


def _round_up(x, m):
    return ((x + m - 1) // m) * m


def _cdiv(a, b):
    return (a + b - 1) // b


def _adjust_kernel(x_ref, w_ref, shift_ref, o_ref):
    # x_ref:     (1, Cin, TILE_S)   activation tile (spatial on lanes)
    # w_ref:     (Cout, Cin)        1x1-conv weight with BN scale folded in
    # shift_ref: (Cout, 1)          folded BN/bias shift (f32)
    # o_ref:     (1, Cout, TILE_S)
    #
    # NOTE: for very small Cin/Cout (like the toy test shapes) this matmul
    # under-utilizes the MXU; real GoogLeNet adjust shapes (Cin, Cout >= 256)
    # keep it busy, and the layer is HBM-bandwidth bound either way.
    y = jnp.dot(w_ref[...], x_ref[0], preferred_element_type=jnp.float32)
    o_ref[0] = (y + shift_ref[...]).astype(o_ref.dtype)


def _pick_tile_and_vmem(N, Cin, Cout, S, max_tile_s, x_item, o_item, w_item):
    """Pick the spatial tile and a matching vmem_limit_bytes."""
    tile_s = min(_round_up(max_tile_s, 128), _round_up(S, 128))

    def working_set(ts):
        b = 2 * _round_up(Cin, 8) * ts * x_item                  # input blocks
        b += 2 * _round_up(Cout, 8) * ts * o_item                # output blocks
        b += 2 * _round_up(Cout, 8) * _round_up(Cin, 128) * w_item  # weight
        b += 2 * _round_up(Cout, 8) * 128 * 4                    # shift
        return b

    # Stay well inside the v7x scoped-VMEM budget (64 MiB physical).
    while tile_s > 512 and working_set(tile_s) > (40 << 20):
        tile_s = max(512, ((tile_s // 2) // 128) * 128)

    # Give the 2-TC megacore split several parallel steps when possible,
    # without dropping below a DMA-efficient tile of 512 lanes.
    while N * _cdiv(S, tile_s) < 8:
        new_ts = ((tile_s // 2 + 127) // 128) * 128
        if new_ts < 512 or new_ts >= tile_s:
            break
        tile_s = new_ts

    vmem_limit = int(min(max(int(working_set(tile_s) * 1.5) + (2 << 20),
                             8 << 20),
                         48 << 20))
    return tile_s, vmem_limit


@functools.partial(jax.jit,
                   static_argnames=("crop_pad", "max_tile_s", "out_dtype",
                                    "eps"))
def googlenet_adjust_layer(x_nchw, weight, bias, gamma, beta, running_mean,
                           running_var, *, crop_pad=0, max_tile_s=2048,
                           out_dtype=None, eps=1e-3):
    """x_nchw: (N, Cin, H, W); weight: (Cout, Cin) from a 1x1 conv.

    BatchNorm uses running statistics (nn.BatchNorm2d eval semantics),
    matching the PyTorch module at inference time.
    """
    # TODO(synk): only kernel_size=1 (the module default) is supported; a
    # kernel>1 conv would need an im2col / windowed formulation.
    N, Cin, H, W = x_nchw.shape
    Cout = weight.shape[0]
    out_dtype = jnp.dtype(out_dtype) if out_dtype is not None else x_nchw.dtype

    # PyTorch gates the crop on the conv-output width, which equals W for a
    # 1x1 conv with default stride/padding.
    crop_active = crop_pad > 0 and W > 25
    # Apply the crop on whichever side moves fewer HBM bytes.  For a
    # channel-reduce layer (Cout < Cin) that is the output.
    crop_input_side = crop_active and Cin <= Cout
    if crop_input_side:
        x_nchw = x_nchw[:, :, crop_pad:-crop_pad, crop_pad:-crop_pad]
        H -= 2 * crop_pad
        W -= 2 * crop_pad

    # --- fold BatchNorm (eval) + conv bias into weight / per-channel shift --
    bn_scale = gamma.astype(jnp.float32) / jnp.sqrt(
        running_var.astype(jnp.float32) + eps)                       # (Cout,)
    w_folded = (weight.astype(jnp.float32)
                * bn_scale[:, None]).astype(x_nchw.dtype)            # (Cout, Cin)
    shift_col = (bn_scale * (bias.astype(jnp.float32)
                             - running_mean.astype(jnp.float32))
                 + beta.astype(jnp.float32)).reshape(Cout, 1)        # f32

    # --- flatten spatial (free reshape; no pad, Pallas masks the edge) ------
    S = H * W
    x_flat = x_nchw.reshape(N, Cin, S)

    x_item = jnp.dtype(x_flat.dtype).itemsize
    o_item = jnp.dtype(out_dtype).itemsize
    w_item = jnp.dtype(w_folded.dtype).itemsize
    tile_s, vmem_limit = _pick_tile_and_vmem(N, Cin, Cout, S, max_tile_s,
                                             x_item, o_item, w_item)
    grid = (N, _cdiv(S, tile_s))

    out_flat = pl.pallas_call(
        _adjust_kernel,
        out_shape=jax.ShapeDtypeStruct((N, Cout, S), out_dtype),
        grid_spec=pltpu.PrefetchScalarGridSpec(
            num_scalar_prefetch=0,
            grid=grid,
            in_specs=[
                pl.BlockSpec((1, Cin, tile_s), lambda n, s: (n, 0, s)),
                # Grid-invariant weight / shift (same block every step).
                pl.BlockSpec((Cout, Cin), lambda n, s: (0, 0)),
                pl.BlockSpec((Cout, 1), lambda n, s: (0, 0)),
            ],
            out_specs=pl.BlockSpec((1, Cout, tile_s), lambda n, s: (n, 0, s)),
        ),
        compiler_params=pltpu.CompilerParams(
            dimension_semantics=("parallel", "parallel"),
            vmem_limit_bytes=vmem_limit),
    )(x_flat, w_folded, shift_col)

    out = out_flat.reshape(N, Cout, H, W)                      # free reshape
    if crop_active and not crop_input_side:
        out = out[:, :, crop_pad:-crop_pad, crop_pad:-crop_pad]
    return out


def _reference(x_nchw, weight, bias, gamma, beta, mean, var, *, crop_pad=0,
               eps=1e-3):
    # Pure-JAX reference matching the PyTorch module (eval-mode BN).
    y = jnp.einsum("nchw,oc->nohw", x_nchw, weight) + bias[None, :, None, None]
    y = (y - mean[None, :, None, None]) / jnp.sqrt(var[None, :, None, None] + eps)
    y = y * gamma[None, :, None, None] + beta[None, :, None, None]
    if y.shape[-1] > 25 and crop_pad > 0:
        y = y[:, :, crop_pad:-crop_pad, crop_pad:-crop_pad]
    return y


if __name__ == "__main__":
    key = jax.random.PRNGKey(0)
    N, Cin, Cout, H, W = 2, 16, 8, 16, 16
    crop_pad = 0  # module default

    keys = jax.random.split(key, 7)
    x = jax.random.normal(keys[0], (N, Cin, H, W), dtype=jnp.float32)
    weight = jax.random.normal(keys[1], (Cout, Cin), dtype=jnp.float32) * 0.1
    bias = jax.random.normal(keys[2], (Cout,), dtype=jnp.float32) * 0.1
    gamma = 1.0 + 0.1 * jax.random.normal(keys[3], (Cout,), dtype=jnp.float32)
    beta = 0.1 * jax.random.normal(keys[4], (Cout,), dtype=jnp.float32)
    running_mean = 0.1 * jax.random.normal(keys[5], (Cout,), dtype=jnp.float32)
    running_var = jnp.abs(1.0 + 0.1 * jax.random.normal(keys[6], (Cout,),
                                                        dtype=jnp.float32))

    # --- main path: no crop, spatial size is a lane multiple ---------------
    out = googlenet_adjust_layer(x, weight, bias, gamma, beta,
                                 running_mean, running_var,
                                 crop_pad=crop_pad)
    out = jax.block_until_ready(out)
    ref = _reference(x, weight, bias, gamma, beta, running_mean, running_var,
                     crop_pad=crop_pad)
    assert out.shape == ref.shape == (N, Cout, H, W), out.shape
    assert jnp.allclose(out, ref, atol=1e-4, rtol=1e-4), "mismatch vs reference"

    # --- non-tile-multiple spatial size + active crop path (W > 25) --------
    H2 = W2 = 31
    x2 = jax.random.normal(keys[0], (N, Cin, H2, W2), dtype=jnp.float32)
    out2 = jax.block_until_ready(
        googlenet_adjust_layer(x2, weight, bias, gamma, beta,
                               running_mean, running_var, crop_pad=2))
    ref2 = _reference(x2, weight, bias, gamma, beta, running_mean, running_var,
                      crop_pad=2)
    assert out2.shape == ref2.shape, (out2.shape, ref2.shape)
    assert jnp.allclose(out2, ref2, atol=1e-4, rtol=1e-4), "mismatch (crop)"

    print("KERNEL_OK")
</pallas_src>

<mosaic_0001>
module attributes {stable_mosaic.version = 11 : i64} {
  func.func @_adjust_kernel(%arg0: i32, %arg1: i32, %arg2: memref<1x16x256xf32, #tpu.memory_space<vmem>>, %arg3: memref<8x16xf32, #tpu.memory_space<vmem>>, %arg4: memref<8x1xf32, #tpu.memory_space<vmem>>, %arg5: memref<1x8x256xf32, #tpu.memory_space<vmem>>) attributes {dimension_semantics = [#tpu.dimension_semantics<parallel>, #tpu.dimension_semantics<parallel>], iteration_bounds = array<i64: 2, 1>, scalar_prefetch = 0 : i64, scratch_operands = 0 : i64, tpu.core_type = #tpu.core_type<tc>, window_params = [{transform_indices = @transform_0, window_bounds = array<i64: 1, 16, 256>}, {pipeline_mode = #tpu.pipeline_mode<synchronous>, transform_indices = @transform_1, window_bounds = array<i64: 8, 16>}, {pipeline_mode = #tpu.pipeline_mode<synchronous>, transform_indices = @transform_2, window_bounds = array<i64: 8, 1>}, {transform_indices = @transform_3, window_bounds = array<i64: 1, 8, 256>}]} {
    %c0 = arith.constant 0 : index
    %c0_0 = arith.constant 0 : index
    %0 = vector.load %arg3[%c0, %c0_0] : memref<8x16xf32, #tpu.memory_space<vmem>>, vector<8x16xf32>
    %c0_1 = arith.constant 0 : index
    %c0_2 = arith.constant 0 : index
    %c0_3 = arith.constant 0 : index
    %1 = vector.load %arg2[%c0_1, %c0_2, %c0_3] : memref<1x16x256xf32, #tpu.memory_space<vmem>>, vector<1x16x256xf32>
    %2 = vector.shape_cast %1 : vector<1x16x256xf32> to vector<16x256xf32>
    %cst = arith.constant dense<0.000000e+00> : vector<8x256xf32>
    %3 = tpu.matmul %0, %2, %cst {dimension_numbers = #tpu.dot_dimension_numbers<[1], [0], [0], [1], [0, 0, 1, 1], [], []>} : vector<8x16xf32>, vector<16x256xf32>, vector<8x256xf32> -> vector<8x256xf32>
    %c0_4 = arith.constant 0 : index
    %c0_5 = arith.constant 0 : index
    %4 = vector.load %arg4[%c0_4, %c0_5] : memref<8x1xf32, #tpu.memory_space<vmem>>, vector<8x1xf32>
    %5 = vector.broadcast %4 : vector<8x1xf32> to vector<8x256xf32>
    %6 = arith.addf %3, %5 : vector<8x256xf32>
    %c0_6 = arith.constant 0 : index
    %c0_7 = arith.constant 0 : index
    %c0_8 = arith.constant 0 : index
    %7 = vector.load %arg5[%c0_6, %c0_7, %c0_8] : memref<1x8x256xf32, #tpu.memory_space<vmem>>, vector<1x8x256xf32>
    %8 = vector.shape_cast %7 : vector<1x8x256xf32> to vector<8x256xf32>
    %9 = vector.shape_cast %6 : vector<8x256xf32> to vector<1x8x256xf32>
    tpu.vector_store %arg5[%c0_6, %c0_7, %c0_8], %9 {strides = array<i32>} : memref<1x8x256xf32, #tpu.memory_space<vmem>>, vector<1x8x256xf32>,
    return
  }
  func.func @transform_0(%arg0: i32, %arg1: i32) -> (i32, i32, i32) {
    %c0_i32 = arith.constant 0 : i32
    %c0_i32_0 = arith.constant 0 : i32
    return %arg0, %c0_i32, %arg1 : i32, i32, i32
  }
  func.func @transform_1(%arg0: i32, %arg1: i32) -> (i32, i32) {
    %c0_i32 = arith.constant 0 : i32
    %c0_i32_0 = arith.constant 0 : i32
    %c0_i32_1 = arith.constant 0 : i32
    return %c0_i32, %c0_i32_0 : i32, i32
  }
  func.func @transform_2(%arg0: i32, %arg1: i32) -> (i32, i32) {
    %c0_i32 = arith.constant 0 : i32
    %c0_i32_0 = arith.constant 0 : i32
    %c0_i32_1 = arith.constant 0 : i32
    return %c0_i32, %c0_i32_0 : i32, i32
  }
  func.func @transform_3(%arg0: i32, %arg1: i32) -> (i32, i32, i32) {
    %c0_i32 = arith.constant 0 : i32
    %c0_i32_0 = arith.constant 0 : i32
    return %arg0, %c0_i32, %arg1 : i32, i32, i32
  }
}

</mosaic_0001>

<llo_original>
// kernel: googlenet_adjust_layer.1
$region0: #{googlenet_adjust_layer.1}
  #allocation0 [shape = 'u32[]', space=smem, size = 0x4, offset = 0x4, fixed_abs, tag = 'smem constant byte address 0x4 - core index']
  #allocation1 [shape = 'u32[144,128]{1,0:T(1,128)}', space=vmem, size = 0x12000, scoped, tag = 'internal scratch']
  %s0 = inlined_call_operand.vmem [shape: f32[2,16,256], index: 0, kind: input, shape index: {}]
  %s1 = inlined_call_operand.vmem [shape: f32[8,16], index: 1, kind: input, shape index: {}]
  %s2 = inlined_call_operand.vmem [shape: f32[8,1], index: 2, kind: input, shape index: {}]
  %s3 = inlined_call_operand.vmem [shape: f32[2,8,256], index: 3, kind: output, shape index: {}]
  %s4 = sld [smem:[#allocation0]]
  $region45: #{googlenet_adjust_layer.1} parent=0
    _
  %s6 = ssub.s32 1, %s4
  %s7 = scalar_select 0, %s6, %s4
  loop: start=0, step=1, limit=4
  $region2: #{googlenet_adjust_layer.1} parent=0 // loop_pre_header
    _
  $region3: #{googlenet_adjust_layer.1} parent=0 // loop_header
    %s9 = sphi 0, %s13
    %p10 = scmp.ge.s32.totalorder %s9, 4
    %s16 = sphi 0, %s28
    %s17 = sphi 0, %s24
    %s18 = sphi 0, %s16
    %s19 = sphi 0, %s17
    %s20 = sphi 0, %s18
    %s21 = sphi 0, %s19
    %s33 = sphi 0, %s35
    %s36 = sphi 0, %s33
    %s37 = sphi 0, %s36
    %s53 = sphi 0, %s37
    %s57 = sphi 0, %s57
    %s59 = sphi 0, %s57
    %s60 = sphi 0, %s59
    %s74 = sphi 0, %s60
    %s78 = sphi 0, %s78
    %s80 = sphi 0, %s78
    %s81 = sphi 0, %s80
    %s95 = sphi 0, %s81
    %s103 = sphi 0, %s105
    %s106 = sphi 0, %s103
    %s107 = sphi 0, %s106
    %s123 = sphi 0, %s107
  $region4: #{googlenet_adjust_layer.1} parent=0 // loop_header_branch
    %12 = sbr.rel (%p10) target = $region8
  $region5: #{googlenet_adjust_layer.1} parent=0 // loop_body
    %s14 = ssub.s32 %s9, 1
    %s15 = ssub.s32 %s9, 2
    %s22 = sadd.s32 1, %s17
    %p23 = scmp.ge.s32.totalorder %s22, 1
    %s24 = scalar_select %p23, 0, %s22
    %s25 = sadd.s32 1, %s16
    %s26 = scalar_select %p23, %s25, %s16
    %p27 = scmp.ge.s32.totalorder %s26, 2
    %s28 = scalar_select %p27, 0, %s26
    %s29 = ssub.s32 %s16, %s28
    %s30 = ssub.s32 %s17, %s24
    %s31 = sor.u32 %s29, %s30
    %p32 = scmp.eq.s32.totalorder %s31, 0
    %s34 = sadd.s32 %s33, 1
    %s35 = scalar_select %p32, %s33, %s34
    %p38 = pneg %p32
    %p39 = scmp.eq.s32.totalorder %s9, 1
    %p40 = por %p38, %p39
    %p41 = scmp.ne.s32.totalorder %s33, %s36
    %p42 = scmp.eq.s32.totalorder %s9, 0
    %p43 = por %p41, %p42
    %p44 = scmp.ne.s32.totalorder %s33, %s36
    %p45 = scmp.eq.s32.totalorder %s14, 1
    %p46 = por %p44, %p45
    %p47 = scmp.ne.s32.totalorder %s36, %s37
    %p48 = scmp.eq.s32.totalorder %s14, 0
    %p49 = por %p47, %p48
    %p50 = scmp.ne.s32.totalorder %s36, %s37
    %p51 = scmp.eq.s32.totalorder %s15, 1
    %p52 = por %p50, %p51
    %p54 = scmp.ne.s32.totalorder %s37, %s53
    %p55 = scmp.eq.s32.totalorder %s15, 0
    %p56 = por %p54, %p55
    %s58 = sadd.s32 %s57, 1
    %p61 = scmp.eq.s32.totalorder %s9, 1
    %p62 = scmp.ne.s32.totalorder %s57, %s59
    %p63 = scmp.eq.s32.totalorder %s9, 0
    %p64 = por %p62, %p63
    %p65 = scmp.ne.s32.totalorder %s57, %s59
    %p66 = scmp.eq.s32.totalorder %s14, 1
    %p67 = por %p65, %p66
    %p68 = scmp.ne.s32.totalorder %s59, %s60
    %p69 = scmp.eq.s32.totalorder %s14, 0
    %p70 = por %p68, %p69
    %p71 = scmp.ne.s32.totalorder %s59, %s60
    %p72 = scmp.eq.s32.totalorder %s15, 1
    %p73 = por %p71, %p72
    %p75 = scmp.ne.s32.totalorder %s60, %s74
    %p76 = scmp.eq.s32.totalorder %s15, 0
    %p77 = por %p75, %p76
    %s79 = sadd.s32 %s78, 1
    %p82 = scmp.eq.s32.totalorder %s9, 1
    %p83 = scmp.ne.s32.totalorder %s78, %s80
    %p84 = scmp.eq.s32.totalorder %s9, 0
    %p85 = por %p83, %p84
    %p86 = scmp.ne.s32.totalorder %s78, %s80
    %p87 = scmp.eq.s32.totalorder %s14, 1
    %p88 = por %p86, %p87
    %p89 = scmp.ne.s32.totalorder %s80, %s81
    %p90 = scmp.eq.s32.totalorder %s14, 0
    %p91 = por %p89, %p90
    %p92 = scmp.ne.s32.totalorder %s80, %s81
    %p93 = scmp.eq.s32.totalorder %s15, 1
    %p94 = por %p92, %p93
    %p96 = scmp.ne.s32.totalorder %s81, %s95
    %p97 = scmp.eq.s32.totalorder %s15, 0
    %p98 = por %p96, %p97
    %s99 = ssub.s32 %s16, %s28
    %s100 = ssub.s32 %s17, %s24
    %s101 = sor.u32 %s99, %s100
    %p102 = scmp.eq.s32.totalorder %s101, 0
    %s104 = sadd.s32 %s103, 1
    %s105 = scalar_select %p102, %s103, %s104
    %p108 = pneg %p102
    %p109 = scmp.eq.s32.totalorder %s9, 1
    %p110 = por %p108, %p109
    %p111 = scmp.ne.s32.totalorder %s103, %s106
    %p112 = scmp.eq.s32.totalorder %s9, 0
    %p113 = por %p111, %p112
    %p114 = scmp.ne.s32.totalorder %s103, %s106
    %p115 = scmp.eq.s32.totalorder %s14, 1
    %p116 = por %p114, %p115
    %p117 = scmp.ne.s32.totalorder %s106, %s107
    %p118 = scmp.eq.s32.totalorder %s14, 0
    %p119 = por %p117, %p118
    %p120 = scmp.ne.s32.totalorder %s106, %s107
    %p121 = scmp.eq.s32.totalorder %s15, 1
    %p122 = por %p120, %p121
    %p124 = scmp.ne.s32.totalorder %s107, %s123
    %p125 = scmp.eq.s32.totalorder %s15, 0
    %p126 = por %p124, %p125
    %p127 = scmp.le.s32.totalorder 1, %s9
    %p128 = scmp.lt.s32.totalorder %s9, 3
    %p129 = pnand %p127, %p128
    %p130 = pneg %p129
    // Predicated region
    $region9: #{googlenet_adjust_layer.1} parent=5 // pred_check
      _
    $region10: #{googlenet_adjust_layer.1} parent=5 // pred_check_branch
      %132 = sbr.rel (%p129) target = $region12
    $region11: #{googlenet_adjust_layer.1} parent=5 // pred_region
      %s133 = ssub.s32 %s9, 1
      // Predicated region
      $region13: #{googlenet_adjust_layer.1} parent=11 // pred_check
        %p134 = pneg %p70
      $region14: #{googlenet_adjust_layer.1} parent=11 // pred_check_branch
        %136 = sbr.rel (%p134) target = $region16
      $region15: #{googlenet_adjust_layer.1} parent=11 // pred_region
        _
      $region16: #{googlenet_adjust_layer.1} parent=11 // pred_fallthru
        _
      // Predicated region
      $region17: #{googlenet_adjust_layer.1} parent=11 // pred_check
        %p137 = pneg %p91
      $region18: #{googlenet_adjust_layer.1} parent=11 // pred_check_branch
        %139 = sbr.rel (%p137) target = $region20
      $region19: #{googlenet_adjust_layer.1} parent=11 // pred_region
        _
      $region20: #{googlenet_adjust_layer.1} parent=11 // pred_fallthru
        _
    $region12: #{googlenet_adjust_layer.1} parent=5 // pred_fallthru
      _
    %p140 = scmp.lt.s32.totalorder %s9, 2
    // Predicated region
    $region21: #{googlenet_adjust_layer.1} parent=5 // pred_check
      %p141 = pneg %p140
    $region22: #{googlenet_adjust_layer.1} parent=5 // pred_check_branch
      %143 = sbr.rel (%p141) target = $region24
    $region23: #{googlenet_adjust_layer.1} parent=5 // pred_region
      // Predicated region
      $region25: #{googlenet_adjust_layer.1} parent=23 // pred_check
        %p144 = pneg %p43
      $region26: #{googlenet_adjust_layer.1} parent=23 // pred_check_branch
        %146 = sbr.rel (%p144) target = $region28
      $region27: #{googlenet_adjust_layer.1} parent=23 // pred_region
        %s147 = smul.u32 2, %s17
        %p148 = scmp.lt.s32.totalorder %s16, 1
        %s149 = scalar_select %p148, %s16, 1
        %p150 = scmp.lt.s32.totalorder %s147, 1
        %s151 = scalar_select %p150, %s147, 1
        %s152 = smul.addr %s149, 4
        %s153 = sadd.s32 %s151, %s152
        %s154 = smul.addr %s153, 8
        %s155 = scalar_lea.vmem %s0, %s154
        %s156 = smul.u32 2, %s17
      $region28: #{googlenet_adjust_layer.1} parent=23 // pred_fallthru
        _
    $region24: #{googlenet_adjust_layer.1} parent=5 // pred_fallthru
      _
    %p157 = scmp.le.s32.totalorder 1, %s9
    %p158 = scmp.lt.s32.totalorder %s9, 3
    %p159 = pnand %p157, %p158
    %p160 = pneg %p159
    // Predicated region
    $region29: #{googlenet_adjust_layer.1} parent=5 // pred_check
      _
    $region30: #{googlenet_adjust_layer.1} parent=5 // pred_check_branch
      %162 = sbr.rel (%p159) target = $region32
    $region31: #{googlenet_adjust_layer.1} parent=5 // pred_region
      %s163 = ssub.s32 %s9, 1
      %s164 = smul.u32 2, %s19
      %p165 = scmp.lt.s32.totalorder %s18, 1
      %s166 = scalar_select %p165, %s18, 1
      %p167 = scmp.lt.s32.totalorder %s164, 1
      %s168 = scalar_select %p167, %s164, 1
      %s169 = smul.addr %s166, 4
      %s170 = sadd.s32 %s168, %s169
      %s171 = smul.addr %s170, 8
      %s172 = scalar_lea.vmem %s0, %s171
      %p173 = pneg %p49
      %p174 = pneg %p46
      %p175 = pneg %p70
      %p176 = pneg %p67
      %p177 = pneg %p91
      %p178 = pneg %p88
      %p179 = pneg %p119
      %p180 = pneg %p116
      %s181 = smul.u32 2, %s19
      %p182 = scmp.lt.s32.totalorder %s18, 1
      %s183 = scalar_select %p182, %s18, 1
      %p184 = scmp.lt.s32.totalorder %s181, 1
      %s185 = scalar_select %p184, %s181, 1
      %s186 = smul.addr %s183, 2
      %s187 = sadd.s32 %s185, %s186
      %s188 = smul.addr %s187, 8
      %s189 = scalar_lea.vmem %s3, %s188
      %s190 = smul.u32 2, %s19
      %p191 = scmp.lt.s32.totalorder %s18, 1
      %s192 = scalar_select %p191, %s18, 1
      %p193 = scmp.lt.s32.totalorder %s190, 1
      %s194 = scalar_select %p193, %s190, 1
      %s195 = smul.addr %s192, 4
      %s196 = sadd.s32 %s194, %s195
      %s197 = smul.addr %s196, 8
      %s198 = scalar_lea.vmem %s0, %s197
      %s199 = smul.u32 2, %s19
      %s200 = smul.u32 2, %s19
      %p201 = scmp.lt.s32.totalorder %s18, 1
      %s202 = scalar_select %p201, %s18, 1
      %p203 = scmp.lt.s32.totalorder %s200, 1
      %s204 = scalar_select %p203, %s200, 1
      %s205 = smul.addr %s202, 2
      %s206 = sadd.s32 %s204, %s205
      %s207 = smul.addr %s206, 8
      %s208 = scalar_lea.vmem %s3, %s207
      %s209 = smul.u32 2, %s19
      %v210 = vld [vmem:[%s1] sm:$0xff]
      %v211 = vld [vmem:[%s198] sm:$0xff]
      %v212 = vld [vmem:[%s198 + $0x8] sm:$0xff]
      %v213 = vld [vmem:[%s198 + $0x10] sm:$0xff]
      %v214 = vld [vmem:[%s198 + $0x18] sm:$0xff]
      %v215 = vld [vmem:[%s2] sm:$0xff]
      %217 = vset.pattern.permute.xlu0 0
      %218 = vperm.xlu0 %217, %v215
      %v219 = vpop.permute.xlu0 %218
      %vm221 = vcmask 130048
      %v223 = vsel %vm221, %v210, 0
      %225 = vmatprep.subr.mxu0 %v212
      %226 = vmatpush1.msra.mxu0 %v211
      %227 = vmatprep.subr.mxu0 %v214
      %228 = vmatpush1.msra.mxu0 %v213
      %229 = vmatprep.subr.mxu0 0.0
      %230 = vmatpush1.msra.mxu0 0.0
      %231 = vmatprep.subr.mxu0 0.0
      %232 = vmatpush1.msra.mxu0 0.0
      %233 = vmatprep.subr.mxu0 0.0
      %234 = vmatpush1.msra.mxu0 0.0
      %235 = vmatprep.subr.mxu0 0.0
      %236 = vmatpush1.msra.mxu0 0.0
      %237 = vmatprep.subr.mxu0 0.0
      %238 = vmatpush1.msra.mxu0 0.0
      %239 = vmatprep.subr.mxu0 0.0
      %240 = vmatpush1.msra.mxu0 0.0
      %241 = vmatprep.subr.mxu0 0.0
      %242 = vmatpush1.msra.mxu0 0.0
      %243 = vmatprep.subr.mxu0 0.0
      %244 = vmatpush1.msra.mxu0 0.0
      %245 = vmatprep.subr.mxu0 0.0
      %246 = vmatpush1.msra.mxu0 0.0
      %247 = vmatprep.subr.mxu0 0.0
      %248 = vmatpush1.msra.mxu0 0.0
      %249 = vmatprep.subr.mxu0 0.0
      %250 = vmatpush1.msra.mxu0 0.0
      %251 = vmatprep.subr.mxu0 0.0
      %252 = vmatpush1.msra.mxu0 0.0
      %253 = vmatprep.subr.mxu0 0.0
      %254 = vmatpush1.msra.mxu0 0.0
      %255 = vmatprep.subr.mxu0 0.0
      %256 = vmatpush1.msra.mxu0 0.0
      %257 = vmatprep.subr.mxu0 0.0
      %258 = vmatpush1.msra.mxu0 0.0
      %259 = vmatprep.subr.mxu0 0.0
      %260 = vmatpush1.msra.mxu0 0.0
      %261 = vmatprep.subr.mxu0 0.0
      %262 = vmatpush1.msra.mxu0 0.0
      %263 = vmatprep.subr.mxu0 0.0
      %264 = vmatpush1.msra.mxu0 0.0
      %265 = vmatprep.subr.mxu0 0.0
      %266 = vmatpush1.msra.mxu0 0.0
      %267 = vmatprep.subr.mxu0 0.0
      %268 = vmatpush1.msra.mxu0 0.0
      %269 = vmatprep.subr.mxu0 0.0
      %270 = vmatpush1.msra.mxu0 0.0
      %271 = vmatprep.subr.mxu0 0.0
      %272 = vmatpush1.msra.mxu0 0.0
      %273 = vmatprep.subr.mxu0 0.0
      %274 = vmatpush1.msra.mxu0 0.0
      %275 = vmatprep.subr.mxu0 0.0
      %276 = vmatpush1.msra.mxu0 0.0
      %277 = vmatprep.subr.mxu0 0.0
      %278 = vmatpush1.msra.mxu0 0.0
      %279 = vmatprep.subr.mxu0 0.0
      %280 = vmatpush1.msra.mxu0 0.0
      %281 = vmatprep.subr.mxu0 0.0
      %282 = vmatpush1.msra.mxu0 0.0
      %283 = vmatprep.subr.mxu0 0.0
      %284 = vmatpush1.msra.mxu0 0.0
      %285 = vmatprep.subr.mxu0 0.0
      %286 = vmatpush1.msra.mxu0 0.0
      %287 = vmatprep.subr.mxu0 0.0
      %288 = vmatpush1.msra.mxu0 0.0
      %289 = vmatprep.mubr.f32.mxu0 0.0
      %290 = vmatmul.mubr.f32.gmra.mrb[0].mxu0 %v223
      %v291 = vpop.f32.mrb[0].mxu0
      %v292 = vadd.f32 %v219, %v291
      %v293 = vpop.f32.mrb[0].mxu0
      %v294 = vadd.f32 %v219, %v293
      %295 = vdwg.mxu0
      %296 = vst [vmem:[%s208] sm:$0xff] %v292
      %297 = vst [vmem:[%s208 + $0x8] sm:$0xff] %v294
      %s298 = smul.u32 2, %s19
      %p299 = scmp.lt.s32.totalorder %s18, 1
      %s300 = scalar_select %p299, %s18, 1
      %p301 = scmp.lt.s32.totalorder %s298, 1
      %s302 = scalar_select %p301, %s298, 1
      %s303 = smul.addr %s300, 2
      %s304 = sadd.s32 %s302, %s303
      %s305 = smul.addr %s304, 8
      %s306 = scalar_lea.vmem %s3, %s305
      // Predicated region
      $region33: #{googlenet_adjust_layer.1} parent=31 // pred_check
        %p307 = pneg %p116
      $region34: #{googlenet_adjust_layer.1} parent=31 // pred_check_branch
        %309 = sbr.rel (%p307) target = $region36
      $region35: #{googlenet_adjust_layer.1} parent=31 // pred_region
        %s310 = smul.u32 2, %s19
      $region36: #{googlenet_adjust_layer.1} parent=31 // pred_fallthru
        _
    $region32: #{googlenet_adjust_layer.1} parent=5 // pred_fallthru
      _
    %p311 = scmp.le.s32.totalorder 2, %s9
    // Predicated region
    $region37: #{googlenet_adjust_layer.1} parent=5 // pred_check
      %p312 = pneg %p311
    $region38: #{googlenet_adjust_layer.1} parent=5 // pred_check_branch
      %314 = sbr.rel (%p312) target = $region40
    $region39: #{googlenet_adjust_layer.1} parent=5 // pred_region
      %s315 = ssub.s32 %s9, 2
      // Predicated region
      $region41: #{googlenet_adjust_layer.1} parent=39 // pred_check
        %p316 = pneg %p122
      $region42: #{googlenet_adjust_layer.1} parent=39 // pred_check_branch
        %318 = sbr.rel (%p316) target = $region44
      $region43: #{googlenet_adjust_layer.1} parent=39 // pred_region
        %s319 = smul.u32 2, %s21
        %p320 = scmp.lt.s32.totalorder %s20, 1
        %s321 = scalar_select %p320, %s20, 1
        %p322 = scmp.lt.s32.totalorder %s319, 1
        %s323 = scalar_select %p322, %s319, 1
        %s324 = smul.addr %s321, 2
        %s325 = sadd.s32 %s323, %s324
        %s326 = smul.addr %s325, 8
        %s327 = scalar_lea.vmem %s3, %s326
      $region44: #{googlenet_adjust_layer.1} parent=39 // pred_fallthru
        _
    $region40: #{googlenet_adjust_layer.1} parent=5 // pred_fallthru
      _
  $region6: #{googlenet_adjust_layer.1} parent=0 // loop_footer
    %s13 = sadd.s32 1, %s9
  $region7: #{googlenet_adjust_layer.1} parent=0 // loop_footer_branch
    %8 = sbr.rel target = $region3
  $region8: #{googlenet_adjust_layer.1} parent=0 // loop_exit
    _

</llo_original>
